<compile_context>
chip_gen: v7x
topology: tpu7x:2x2x1
jax: 0.10.0
libtpu: 0.0.40
codegen_flags: <defaults>
</compile_context>

<pallas_src>
import functools

import jax
import jax.numpy as jnp
from jax import lax
from jax.experimental import pallas as pl
from jax.experimental.pallas import tpu as pltpu

LANES = 128
MAX_BLOCK_ROWS = 8192   # (8192,128) f32 = 4 MiB/block; 2 inputs x 2 buffers = 16 MiB
NCORES = 2              # leading "parallel" grid axis (2 TCs on v7x; cheap loop on v5e/v6e)


def _round_up(x, m):
    return ((x + m - 1) // m) * m


def _elementwise_loss(x, y, alpha):
    """Per-element BCEBlur loss (f32), used for the unaligned tail + reference."""
    x = x.astype(jnp.float32)
    y = y.astype(jnp.float32)
    e = jnp.exp(-jnp.abs(x))
    loss = jnp.maximum(x, 0.0) - x * y + jnp.log1p(e)
    p = jnp.where(x >= 0.0, 1.0 / (1.0 + e), e / (1.0 + e))
    return loss * (1.0 - jnp.exp((p - y - 1.0) / (alpha + 0.0001)))


def _bce_blur_kernel(pred_ref, true_ref, out_ref, *, alpha, valid_rows, block_rows):
    j = pl.program_id(1)
    nsteps = pl.num_programs(1)

    @pl.when(j == 0)
    def _():
        out_ref[...] = jnp.zeros_like(out_ref)

    x = pred_ref[...].astype(jnp.float32)
    y = true_ref[...].astype(jnp.float32)

    # Numerically-stable BCEWithLogitsLoss(reduction='none'):
    #   loss = max(x, 0) - x*y + log1p(exp(-|x|))
    # Share e = exp(-|x|) with the sigmoid:
    #   sigmoid(x) = 1/(1+e)  if x >= 0   else   e/(1+e)
    e = jnp.exp(-jnp.abs(x))
    loss = jnp.maximum(x, 0.0) - x * y + jnp.log1p(e)

    d = 1.0 + e
    inv = pl.reciprocal(d, approx=True)
    inv = inv * (2.0 - d * inv)          # one Newton step -> ~f32-exact 1/(1+e), VALU-only
    p = jnp.where(x >= 0.0, inv, e * inv)

    # Blur factor: 1 - exp((dx - 1) / (alpha + 1e-4)).
    inv_denom = 1.0 / (alpha + 0.0001)
    loss = loss * (1.0 - jnp.exp(((p - y) - 1.0) * inv_denom))

    rows, lanes = loss.shape

    def accumulate(vals):
        # Fold (rows, 128) -> (8, 128) with elementwise vreg adds; the single
        # cross-lane reduce happens in the wrapper on the tiny output slab.
        out_ref[...] += vals.reshape(rows // 8, 8, lanes).sum(axis=0)

    # Row offset of this grid slot (row units => no int32 overflow < 2^38 elems).
    row0 = (pl.program_id(0) * nsteps + j) * block_rows
    needs_mask = row0 + block_rows > valid_rows

    @pl.when(jnp.logical_not(needs_mask))
    def _():
        accumulate(loss)

    @pl.when(needs_mask)
    def _():
        # Only boundary / duplicated-tail blocks pay for the iota + select.
        row_ids = row0 + lax.broadcasted_iota(jnp.int32, (rows, lanes), 0)
        accumulate(jnp.where(row_ids < valid_rows, loss, 0.0))


def bce_blur_with_logits_loss(pred, true, alpha=0.05):
    """Matches BCEBlurWithLogitsLoss(alpha).forward(pred, true) -> scalar mean."""
    assert pred.shape == true.shape
    n_valid = int(pred.size)
    assert n_valid > 0

    flat_p = pred.reshape(-1)
    flat_t = true.reshape(-1)

    main_rows = n_valid // LANES
    n_main = main_rows * LANES
    tail = n_valid - n_main

    # <=127-element unaligned tail handled wrapper-side (no full-array jnp.pad copy).
    tail_sum = jnp.float32(0.0)
    if tail:
        tail_sum = jnp.sum(_elementwise_loss(flat_p[n_main:], flat_t[n_main:], alpha))
        p_main, t_main = flat_p[:n_main], flat_t[:n_main]
    else:
        p_main, t_main = flat_p, flat_t

    if main_rows == 0:
        # Degenerate (<128 elements): nothing for the kernel to stream.
        return (tail_sum / n_valid).astype(jnp.float32)

    p2d = p_main.reshape(main_rows, LANES)
    t2d = t_main.reshape(main_rows, LANES)

    # Tile / grid sizing (adapts down for small inputs).  Multiple of 32 rows
    # keeps bf16/int8 sublane packing aligned; capped so the double-buffered
    # footprint stays ~16 MiB (safe on v7x's 64 MiB VMEM and within the 32 MiB
    # scoped limit everywhere).
    block_rows = min(MAX_BLOCK_ROWS, _round_up(pl.cdiv(main_rows, NCORES), 32))
    block_rows = max(8, min(block_rows, _round_up(main_rows, 8)))
    n_blocks = pl.cdiv(main_rows, block_rows)
    steps = pl.cdiv(n_blocks, NCORES)

    def in_index_map(i, j):
        # Clamp: trailing grid slots re-read the last valid block instead of
        # requiring padded inputs; the kernel's row mask zeroes their
        # duplicated / out-of-range contribution.
        return (jnp.minimum(i * steps + j, n_blocks - 1), 0)

    kernel = functools.partial(_bce_blur_kernel, alpha=float(alpha),
                               valid_rows=main_rows, block_rows=block_rows)

    # NOTE: on v7x the leading "parallel" axis shards the 2 TensorCores; on
    # single-TC v5e/v6e it is a cheap extra loop (<1%).
    partials = pl.pallas_call(
        kernel,
        out_shape=jax.ShapeDtypeStruct((NCORES, 8, LANES), jnp.float32),
        grid_spec=pltpu.PrefetchScalarGridSpec(
            num_scalar_prefetch=0,
            grid=(NCORES, steps),
            in_specs=[
                pl.BlockSpec((block_rows, LANES), in_index_map),
                pl.BlockSpec((block_rows, LANES), in_index_map),
            ],
            out_specs=pl.BlockSpec((None, 8, LANES), lambda i, j: (i, 0, 0)),
        ),
        compiler_params=pltpu.CompilerParams(
            dimension_semantics=("parallel", "arbitrary"),
            vmem_limit_bytes=32 * 1024 * 1024,
        ),
    )(p2d, t2d)

    total = jnp.sum(partials) + tail_sum
    return (total / n_valid).astype(jnp.float32)


def _reference(pred, true, alpha=0.05):
    # Pure-JAX reference mirroring the PyTorch module, for sanity check.
    x = pred.astype(jnp.float32)
    y = true.astype(jnp.float32)
    loss = jnp.maximum(x, 0.0) - x * y + jnp.log1p(jnp.exp(-jnp.abs(x)))
    p = jax.nn.sigmoid(x)
    af = 1.0 - jnp.exp((p - y - 1.0) / (alpha + 0.0001))
    return jnp.mean(loss * af)


if __name__ == "__main__":
    key = jax.random.PRNGKey(0)
    k1, k2, k3, k4 = jax.random.split(key, 4)

    # NCHW inputs, small shape (multiple of 128 -> pure kernel path).
    pred = jax.random.normal(k1, (2, 4, 16, 16), dtype=jnp.float32)
    true = (jax.random.uniform(k2, (2, 4, 16, 16)) > 0.5).astype(jnp.float32)
    out = jax.block_until_ready(bce_blur_with_logits_loss(pred, true, alpha=0.05))
    ref = _reference(pred, true, alpha=0.05)
    assert jnp.allclose(out, ref, rtol=1e-4, atol=1e-6), (out, ref)

    # Unaligned size (858 elements): exercises kernel + wrapper-side tail path.
    pred2 = jax.random.normal(k3, (2, 3, 11, 13), dtype=jnp.float32)
    true2 = (jax.random.uniform(k4, (2, 3, 11, 13)) > 0.5).astype(jnp.float32)
    out2 = jax.block_until_ready(bce_blur_with_logits_loss(pred2, true2, alpha=0.05))
    ref2 = _reference(pred2, true2, alpha=0.05)
    assert jnp.allclose(out2, ref2, rtol=1e-4, atol=1e-6), (out2, ref2)

    print("KERNEL_OK")
</pallas_src>

<mosaic_0001>
module attributes {stable_mosaic.version = 11 : i64} {
  func.func @_bce_blur_kernel(%arg0: i32, %arg1: i32, %arg2: memref<16x128xf32, #tpu.memory_space<vmem>>, %arg3: memref<16x128xf32, #tpu.memory_space<vmem>>, %arg4: memref<1x8x128xf32, #tpu.memory_space<vmem>>) attributes {dimension_semantics = [#tpu.dimension_semantics<parallel>, #tpu.dimension_semantics<arbitrary>], iteration_bounds = array<i64: 2, 1>, scalar_prefetch = 0 : i64, scratch_operands = 0 : i64, tpu.core_type = #tpu.core_type<tc>, window_params = [{transform_indices = @transform_0, window_bounds = array<i64: 16, 128>}, {transform_indices = @transform_1, window_bounds = array<i64: 16, 128>}, {transform_indices = @transform_2, window_bounds = array<i64: 1, 8, 128>}]} {
    %c0_i32 = arith.constant 0 : i32
    %0 = arith.cmpi eq, %arg1, %c0_i32 : i32
    %1 = arith.extui %0 : i1 to i32
    %c0_i32_0 = arith.constant 0 : i32
    %2 = arith.cmpi ne, %1, %c0_i32_0 : i32
    scf.if %2 {
      %cst_15 = arith.constant 0.000000e+00 : f32
      %45 = vector.broadcast %cst_15 : f32 to vector<8x128xf32>
      %c0_16 = arith.constant 0 : index
      %c0_17 = arith.constant 0 : index
      %c0_18 = arith.constant 0 : index
      %46 = vector.load %arg4[%c0_16, %c0_17, %c0_18] : memref<1x8x128xf32, #tpu.memory_space<vmem>>, vector<1x8x128xf32>
      %47 = vector.shape_cast %46 : vector<1x8x128xf32> to vector<8x128xf32>
      %48 = vector.shape_cast %45 : vector<8x128xf32> to vector<1x8x128xf32>
      tpu.vector_store %arg4[%c0_16, %c0_17, %c0_18], %48 {strides = array<i32>} : memref<1x8x128xf32, #tpu.memory_space<vmem>>, vector<1x8x128xf32>,
    } else {
    }
    %c0 = arith.constant 0 : index
    %c0_1 = arith.constant 0 : index
    %3 = vector.load %arg2[%c0, %c0_1] : memref<16x128xf32, #tpu.memory_space<vmem>>, vector<16x128xf32>
    %c0_2 = arith.constant 0 : index
    %c0_3 = arith.constant 0 : index
    %4 = vector.load %arg3[%c0_2, %c0_3] : memref<16x128xf32, #tpu.memory_space<vmem>>, vector<16x128xf32>
    %5 = math.absf %3 : vector<16x128xf32>
    %cst = arith.constant 0.000000e+00 : f32
    %6 = vector.broadcast %cst : f32 to vector<16x128xf32>
    %7 = arith.subf %6, %5 : vector<16x128xf32>
    %8 = math.exp %7 : vector<16x128xf32>
    %cst_4 = arith.constant 0.000000e+00 : f32
    %9 = vector.broadcast %cst_4 : f32 to vector<16x128xf32>
    %10 = arith.maximumf %3, %9 : vector<16x128xf32>
    %11 = arith.mulf %3, %4 : vector<16x128xf32>
    %12 = arith.subf %10, %11 : vector<16x128xf32>
    %13 = math.log1p %8 : vector<16x128xf32>
    %14 = arith.addf %12, %13 : vector<16x128xf32>
    %cst_5 = arith.constant 1.000000e+00 : f32
    %15 = vector.broadcast %cst_5 : f32 to vector<16x128xf32>
    %16 = arith.addf %15, %8 : vector<16x128xf32>
    %17 = tpu.reciprocal %16 {approx = true} : vector<16x128xf32> -> vector<16x128xf32>
    %18 = arith.mulf %16, %17 : vector<16x128xf32>
    %cst_6 = arith.constant 2.000000e+00 : f32
    %19 = vector.broadcast %cst_6 : f32 to vector<16x128xf32>
    %20 = arith.subf %19, %18 : vector<16x128xf32>
    %21 = arith.mulf %17, %20 : vector<16x128xf32>
    %cst_7 = arith.constant 0.000000e+00 : f32
    %22 = vector.broadcast %cst_7 : f32 to vector<16x128xf32>
    %23 = arith.cmpf oge, %3, %22 : vector<16x128xf32>
    %24 = arith.mulf %8, %21 : vector<16x128xf32>
    %25 = arith.select %23, %21, %24 : vector<16x128xi1>, vector<16x128xf32>
    %26 = arith.subf %25, %4 : vector<16x128xf32>
    %cst_8 = arith.constant 1.000000e+00 : f32
    %27 = vector.broadcast %cst_8 : f32 to vector<16x128xf32>
    %28 = arith.subf %26, %27 : vector<16x128xf32>
    %cst_9 = arith.constant 19.9600792 : f32
    %29 = vector.broadcast %cst_9 : f32 to vector<16x128xf32>
    %30 = arith.mulf %28, %29 : vector<16x128xf32>
    %31 = math.exp %30 : vector<16x128xf32>
    %cst_10 = arith.constant 1.000000e+00 : f32
    %32 = vector.broadcast %cst_10 : f32 to vector<16x128xf32>
    %33 = arith.subf %32, %31 : vector<16x128xf32>
    %34 = arith.mulf %14, %33 : vector<16x128xf32>
    %c1_i32 = arith.constant 1 : i32
    %35 = arith.muli %arg0, %c1_i32 : i32
    %36 = arith.addi %35, %arg1 : i32
    %c16_i32 = arith.constant 16 : i32
    %37 = arith.muli %36, %c16_i32 : i32
    %c16_i32_11 = arith.constant 16 : i32
    %38 = arith.addi %37, %c16_i32_11 : i32
    %c16_i32_12 = arith.constant 16 : i32
    %39 = arith.cmpi sgt, %38, %c16_i32_12 : i32
    %true = arith.constant true
    %40 = arith.xori %39, %true : i1
    %41 = arith.extui %40 : i1 to i32
    %c0_i32_13 = arith.constant 0 : i32
    %42 = arith.cmpi ne, %41, %c0_i32_13 : i32
    scf.if %42 {
      %c0_15 = arith.constant 0 : index
      %c0_16 = arith.constant 0 : index
      %c0_17 = arith.constant 0 : index
      %45 = vector.load %arg4[%c0_15, %c0_16, %c0_17] : memref<1x8x128xf32, #tpu.memory_space<vmem>>, vector<1x8x128xf32>
      %46 = vector.shape_cast %45 : vector<1x8x128xf32> to vector<8x128xf32>
      %47 = vector.shape_cast %34 : vector<16x128xf32> to vector<2x8x128xf32>
      %cst_18 = arith.constant dense<0.000000e+00> : vector<8x128xf32>
      %48 = vector.multi_reduction <add>, %47, %cst_18 [0] : vector<2x8x128xf32> to vector<8x128xf32>
      %49 = arith.addf %46, %48 : vector<8x128xf32>
      %c0_19 = arith.constant 0 : index
      %c0_20 = arith.constant 0 : index
      %c0_21 = arith.constant 0 : index
      %50 = vector.load %arg4[%c0_19, %c0_20, %c0_21] : memref<1x8x128xf32, #tpu.memory_space<vmem>>, vector<1x8x128xf32>
      %51 = vector.shape_cast %50 : vector<1x8x128xf32> to vector<8x128xf32>
      %52 = vector.shape_cast %49 : vector<8x128xf32> to vector<1x8x128xf32>
      tpu.vector_store %arg4[%c0_19, %c0_20, %c0_21], %52 {strides = array<i32>} : memref<1x8x128xf32, #tpu.memory_space<vmem>>, vector<1x8x128xf32>,
    } else {
    }
    %43 = arith.extui %39 : i1 to i32
    %c0_i32_14 = arith.constant 0 : i32
    %44 = arith.cmpi ne, %43, %c0_i32_14 : i32
    scf.if %44 {
      %45 = tpu.iota {dimensions = array<i32: 0>} : vector<16x128xi32>
      %46 = vector.broadcast %37 : i32 to vector<16x128xi32>
      %47 = arith.addi %46, %45 : vector<16x128xi32>
      %c16_i32_15 = arith.constant 16 : i32
      %48 = vector.broadcast %c16_i32_15 : i32 to vector<16x128xi32>
      %49 = arith.cmpi slt, %47, %48 : vector<16x128xi32>
      %cst_16 = arith.constant 0.000000e+00 : f32
      %50 = vector.broadcast %cst_16 : f32 to vector<16x128xf32>
      %51 = arith.select %49, %34, %50 : vector<16x128xi1>, vector<16x128xf32>
      %c0_17 = arith.constant 0 : index
      %c0_18 = arith.constant 0 : index
      %c0_19 = arith.constant 0 : index
      %52 = vector.load %arg4[%c0_17, %c0_18, %c0_19] : memref<1x8x128xf32, #tpu.memory_space<vmem>>, vector<1x8x128xf32>
      %53 = vector.shape_cast %52 : vector<1x8x128xf32> to vector<8x128xf32>
      %54 = vector.shape_cast %51 : vector<16x128xf32> to vector<2x8x128xf32>
      %cst_20 = arith.constant dense<0.000000e+00> : vector<8x128xf32>
      %55 = vector.multi_reduction <add>, %54, %cst_20 [0] : vector<2x8x128xf32> to vector<8x128xf32>
      %56 = arith.addf %53, %55 : vector<8x128xf32>
      %c0_21 = arith.constant 0 : index
      %c0_22 = arith.constant 0 : index
      %c0_23 = arith.constant 0 : index
      %57 = vector.load %arg4[%c0_21, %c0_22, %c0_23] : memref<1x8x128xf32, #tpu.memory_space<vmem>>, vector<1x8x128xf32>
      %58 = vector.shape_cast %57 : vector<1x8x128xf32> to vector<8x128xf32>
      %59 = vector.shape_cast %56 : vector<8x128xf32> to vector<1x8x128xf32>
      tpu.vector_store %arg4[%c0_21, %c0_22, %c0_23], %59 {strides = array<i32>} : memref<1x8x128xf32, #tpu.memory_space<vmem>>, vector<1x8x128xf32>,
    } else {
    }
    return
  }
  func.func @transform_0(%arg0: i32, %arg1: i32) -> (i32, i32) {
    %c1_i32 = arith.constant 1 : i32
    %0 = arith.muli %arg0, %c1_i32 : i32
    %1 = arith.addi %0, %arg1 : i32
    %c0_i32 = arith.constant 0 : i32
    %2 = arith.minsi %1, %c0_i32 : i32
    %c0_i32_0 = arith.constant 0 : i32
    %c0_i32_1 = arith.constant 0 : i32
    return %2, %c0_i32_0 : i32, i32
  }
  func.func @transform_1(%arg0: i32, %arg1: i32) -> (i32, i32) {
    %c1_i32 = arith.constant 1 : i32
    %0 = arith.muli %arg0, %c1_i32 : i32
    %1 = arith.addi %0, %arg1 : i32
    %c0_i32 = arith.constant 0 : i32
    %2 = arith.minsi %1, %c0_i32 : i32
    %c0_i32_0 = arith.constant 0 : i32
    %c0_i32_1 = arith.constant 0 : i32
    return %2, %c0_i32_0 : i32, i32
  }
  func.func @transform_2(%arg0: i32, %arg1: i32) -> (i32, i32, i32) {
    %c0_i32 = arith.constant 0 : i32
    %c0_i32_0 = arith.constant 0 : i32
    %c0_i32_1 = arith.constant 0 : i32
    return %arg0, %c0_i32, %c0_i32_0 : i32, i32, i32
  }
}

</mosaic_0001>

<llo_original>
// kernel: tpu_custom_call.1
$region0: #{tpu_custom_call.1}
  #allocation0 [shape = 'u32[]', space=smem, size = 0x4, offset = 0x4, fixed_abs, tag = 'smem constant byte address 0x4 - core index']
  #allocation1 [shape = 'u32[144,128]{1,0:T(1,128)}', space=vmem, size = 0x12000, scoped, tag = 'internal scratch']
  %s0 = inlined_call_operand.hbm [shape: f32[16,128], index: 0, kind: input, shape index: {}]
  %s1 = inlined_call_operand.hbm [shape: f32[16,128], index: 1, kind: input, shape index: {}]
  %s2 = inlined_call_operand.hbm [shape: f32[2,8,128], index: 2, kind: output, shape index: {}]
  %s3 = sld [smem:[#allocation0]]
  $region61: #{tpu_custom_call.1} parent=0
    _
  %s5 = ssub.s32 1, %s3
  %s6 = scalar_select 0, %s5, %s3
  $region1: #{tpu_custom_call.1} parent=0
    #allocation2 [shape = 'u8[16384]{0}', space=vmem, size = 0x4000, scoped, tag = 'input window, operand 0']
    #allocation3 [shape = 's32[2]{0}', space=sflag, size = 0x8, scoped, tag = 'scoped memory for tpu_custom_call.1']
    #allocation4 [shape = 's32[2]{0}', space=sflag, size = 0x8, scoped, tag = 'scoped memory for tpu_custom_call.1']
    #allocation5 [shape = 'u8[16384]{0}', space=vmem, size = 0x4000, scoped, tag = 'input window, operand 1']
    #allocation6 [shape = 's32[2]{0}', space=sflag, size = 0x8, scoped, tag = 'scoped memory for tpu_custom_call.1']
    #allocation7 [shape = 'u8[8192]{0}', space=vmem, size = 0x2000, scoped, tag = 'output window, operand 0']
    %7 = vsyncpa [#allocation3], 0
    %s8 = scalar_lea.sflag [#allocation3], 1
    %9 = vsyncpa %s8, 0
    %10 = vsyncpa [#allocation6], 0
    %s11 = scalar_lea.sflag [#allocation6], 1
    %12 = vsyncpa %s11, 0
    %13 = vsyncpa [#allocation4], 0
    %s14 = scalar_lea.sflag [#allocation4], 1
    %15 = vsyncpa %s14, 0
    loop: start=0, step=1, limit=4
    $region2: #{tpu_custom_call.1} parent=1 // loop_pre_header
      _
    $region3: #{tpu_custom_call.1} parent=1 // loop_header
      %s17 = sphi 0, %s21
      %p18 = scmp.ge.s32.totalorder %s17, 4
      %s24 = sphi 0, %s36
      %s25 = sphi 0, %s32
      %s26 = sphi 0, %s24
      %s27 = sphi 0, %s25
      %s28 = sphi 0, %s26
      %s29 = sphi 0, %s27
      %s45 = sphi 0, %s47
      %s48 = sphi 0, %s45
      %s49 = sphi 0, %s48
      %s65 = sphi 0, %s49
      %s77 = sphi 0, %s79
      %s80 = sphi 0, %s77
      %s81 = sphi 0, %s80
      %s97 = sphi 0, %s81
      %s103 = sphi 0, %s105
      %s106 = sphi 0, %s103
      %s107 = sphi 0, %s106
      %s123 = sphi 0, %s107
    $region4: #{tpu_custom_call.1} parent=1 // loop_header_branch
      %20 = sbr.rel (%p18) target = $region8
    $region5: #{tpu_custom_call.1} parent=1 // loop_body
      %s22 = ssub.s32 %s17, 1
      %s23 = ssub.s32 %s17, 2
      %s30 = sadd.s32 1, %s25
      %p31 = scmp.ge.s32.totalorder %s30, 1
      %s32 = scalar_select %p31, 0, %s30
      %s33 = sadd.s32 1, %s24
      %s34 = scalar_select %p31, %s33, %s24
      %p35 = scmp.ge.s32.totalorder %s34, 2
      %s36 = scalar_select %p35, 0, %s34
      %s37 = sadd.s32 %s24, %s25
      %p38 = scmp.lt.s32.totalorder %s37, 0
      %s39 = scalar_select %p38, %s37, 0
      %s40 = sadd.s32 %s36, %s32
      %p41 = scmp.lt.s32.totalorder %s40, 0
      %s42 = scalar_select %p41, %s40, 0
      %s43 = ssub.s32 %s39, %s42
      %p44 = scmp.eq.s32.totalorder %s43, 0
      %s46 = sadd.s32 %s45, 1
      %s47 = scalar_select %p44, %s45, %s46
      %p50 = pneg %p44
      %p51 = scmp.eq.s32.totalorder %s17, 1
      %p52 = por %p50, %p51
      %p53 = scmp.ne.s32.totalorder %s45, %s48
      %p54 = scmp.eq.s32.totalorder %s17, 0
      %p55 = por %p53, %p54
      %p56 = scmp.ne.s32.totalorder %s45, %s48
      %p57 = scmp.eq.s32.totalorder %s22, 1
      %p58 = por %p56, %p57
      %p59 = scmp.ne.s32.totalorder %s48, %s49
      %p60 = scmp.eq.s32.totalorder %s22, 0
      %p61 = por %p59, %p60
      %p62 = scmp.ne.s32.totalorder %s48, %s49
      %p63 = scmp.eq.s32.totalorder %s23, 1
      %p64 = por %p62, %p63
      %p66 = scmp.ne.s32.totalorder %s49, %s65
      %p67 = scmp.eq.s32.totalorder %s23, 0
      %p68 = por %p66, %p67
      %s69 = sadd.s32 %s24, %s25
      %p70 = scmp.lt.s32.totalorder %s69, 0
      %s71 = scalar_select %p70, %s69, 0
      %s72 = sadd.s32 %s36, %s32
      %p73 = scmp.lt.s32.totalorder %s72, 0
      %s74 = scalar_select %p73, %s72, 0
      %s75 = ssub.s32 %s71, %s74
      %p76 = scmp.eq.s32.totalorder %s75, 0
      %s78 = sadd.s32 %s77, 1
      %s79 = scalar_select %p76, %s77, %s78
      %p82 = pneg %p76
      %p83 = scmp.eq.s32.totalorder %s17, 1
      %p84 = por %p82, %p83
      %p85 = scmp.ne.s32.totalorder %s77, %s80
      %p86 = scmp.eq.s32.totalorder %s17, 0
      %p87 = por %p85, %p86
      %p88 = scmp.ne.s32.totalorder %s77, %s80
      %p89 = scmp.eq.s32.totalorder %s22, 1
      %p90 = por %p88, %p89
      %p91 = scmp.ne.s32.totalorder %s80, %s81
      %p92 = scmp.eq.s32.totalorder %s22, 0
      %p93 = por %p91, %p92
      %p94 = scmp.ne.s32.totalorder %s80, %s81
      %p95 = scmp.eq.s32.totalorder %s23, 1
      %p96 = por %p94, %p95
      %p98 = scmp.ne.s32.totalorder %s81, %s97
      %p99 = scmp.eq.s32.totalorder %s23, 0
      %p100 = por %p98, %p99
      %s101 = ssub.s32 %s24, %s36
      %p102 = scmp.eq.s32.totalorder %s101, 0
      %s104 = sadd.s32 %s103, 1
      %s105 = scalar_select %p102, %s103, %s104
      %p108 = pneg %p102
      %p109 = scmp.eq.s32.totalorder %s17, 1
      %p110 = por %p108, %p109
      %p111 = scmp.ne.s32.totalorder %s103, %s106
      %p112 = scmp.eq.s32.totalorder %s17, 0
      %p113 = por %p111, %p112
      %p114 = scmp.ne.s32.totalorder %s103, %s106
      %p115 = scmp.eq.s32.totalorder %s22, 1
      %p116 = por %p114, %p115
      %p117 = scmp.ne.s32.totalorder %s106, %s107
      %p118 = scmp.eq.s32.totalorder %s22, 0
      %p119 = por %p117, %p118
      %p120 = scmp.ne.s32.totalorder %s106, %s107
      %p121 = scmp.eq.s32.totalorder %s23, 1
      %p122 = por %p120, %p121
      %p124 = scmp.ne.s32.totalorder %s107, %s123
      %p125 = scmp.eq.s32.totalorder %s23, 0
      %p126 = por %p124, %p125
      %p127 = scmp.le.s32.totalorder 1, %s17
      %p128 = scmp.lt.s32.totalorder %s17, 3
      %p129 = pnand %p127, %p128
      %p130 = pneg %p129
      // Predicated region
      $region9: #{tpu_custom_call.1} parent=5 // pred_check
        _
      $region10: #{tpu_custom_call.1} parent=5 // pred_check_branch
        %132 = sbr.rel (%p129) target = $region12
      $region11: #{tpu_custom_call.1} parent=5 // pred_region
        %s133 = ssub.s32 %s17, 1
      $region12: #{tpu_custom_call.1} parent=5 // pred_fallthru
        _
      %p134 = scmp.lt.s32.totalorder %s17, 2
      // Predicated region
      $region13: #{tpu_custom_call.1} parent=5 // pred_check
        %p135 = pneg %p134
      $region14: #{tpu_custom_call.1} parent=5 // pred_check_branch
        %137 = sbr.rel (%p135) target = $region16
      $region15: #{tpu_custom_call.1} parent=5 // pred_region
        // Predicated region
        $region17: #{tpu_custom_call.1} parent=15 // pred_check
          %p138 = pneg %p55
        $region18: #{tpu_custom_call.1} parent=15 // pred_check_branch
          %140 = sbr.rel (%p138) target = $region20
        $region19: #{tpu_custom_call.1} parent=15 // pred_region
          %s141 = sand.u32 %s45, 1
          %s142 = scalar_lea.sflag [#allocation3], %s141
          %s143 = sand.u32 %s45, 1
          %s144 = smul.addr %s143, 16
          %s145 = scalar_lea.vmem [#allocation2], %s144
          %s146 = sadd.s32 %s24, %s25
          %p147 = scmp.lt.s32.totalorder %s146, 0
          %s148 = scalar_select %p147, %s146, 0
          %s149 = smul.u32 2, %s148
          %s151 = ssub.s32 256, 256
          %152 = vsyncadd %s142, %s151
          %s153 = smul.addr %s149, 128
          %s154 = scalar_lea.hbm %s0, %s153
          %s155 = sshll.u32 %s145, 4
          %s156 = int_to_ptr.vmem [resolvable:$true] %s155
          %161 = dma.hbm_to_vmem [thread:$0]  %s154, 256, %s156, %s142, 128, 128, 8
        $region20: #{tpu_custom_call.1} parent=15 // pred_fallthru
          _
        // Predicated region
        $region21: #{tpu_custom_call.1} parent=15 // pred_check
          %p162 = pneg %p87
        $region22: #{tpu_custom_call.1} parent=15 // pred_check_branch
          %164 = sbr.rel (%p162) target = $region24
        $region23: #{tpu_custom_call.1} parent=15 // pred_region
          %s165 = sand.u32 %s77, 1
          %s166 = scalar_lea.sflag [#allocation6], %s165
          %s167 = sand.u32 %s77, 1
          %s168 = smul.addr %s167, 16
          %s169 = scalar_lea.vmem [#allocation5], %s168
          %s170 = sadd.s32 %s24, %s25
          %p171 = scmp.lt.s32.totalorder %s170, 0
          %s172 = scalar_select %p171, %s170, 0
          %s173 = smul.u32 2, %s172
          %s175 = ssub.s32 256, 256
          %176 = vsyncadd %s166, %s175
          %s177 = smul.addr %s173, 128
          %s178 = scalar_lea.hbm %s1, %s177
          %s179 = sshll.u32 %s169, 4
          %s180 = int_to_ptr.vmem [resolvable:$true] %s179
          %185 = dma.hbm_to_vmem [thread:$0]  %s178, 256, %s180, %s166, 128, 128, 8
        $region24: #{tpu_custom_call.1} parent=15 // pred_fallthru
          _
      $region16: #{tpu_custom_call.1} parent=5 // pred_fallthru
        _
      %p186 = scmp.le.s32.totalorder 1, %s17
      %p187 = scmp.lt.s32.totalorder %s17, 3
      %p188 = pnand %p186, %p187
      %p189 = pneg %p188
      // Predicated region
      $region25: #{tpu_custom_call.1} parent=5 // pred_check
        _
      $region26: #{tpu_custom_call.1} parent=5 // pred_check_branch
        %191 = sbr.rel (%p188) target = $region28
      $region27: #{tpu_custom_call.1} parent=5 // pred_region
        %s192 = ssub.s32 %s17, 1
        %s193 = sand.u32 %s48, 1
        %s194 = scalar_lea.sflag [#allocation3], %s193
        %s195 = sand.u32 %s48, 1
        %s196 = smul.addr %s195, 16
        %s197 = scalar_lea.vmem [#allocation2], %s196
        // Predicated region
        $region29: #{tpu_custom_call.1} parent=27 // pred_check
          %p198 = pneg %p61
        $region30: #{tpu_custom_call.1} parent=27 // pred_check_branch
          %200 = sbr.rel (%p198) target = $region32
        $region31: #{tpu_custom_call.1} parent=27 // pred_region
          %201 = dma.done %s194, 256
        $region32: #{tpu_custom_call.1} parent=27 // pred_fallthru
          _
        %s202 = sand.u32 %s80, 1
        %s203 = scalar_lea.sflag [#allocation6], %s202
        %s204 = sand.u32 %s80, 1
        %s205 = smul.addr %s204, 16
        %s206 = scalar_lea.vmem [#allocation5], %s205
        // Predicated region
        $region33: #{tpu_custom_call.1} parent=27 // pred_check
          %p207 = pneg %p93
        $region34: #{tpu_custom_call.1} parent=27 // pred_check_branch
          %209 = sbr.rel (%p207) target = $region36
        $region35: #{tpu_custom_call.1} parent=27 // pred_region
          %210 = dma.done %s203, 256
        $region36: #{tpu_custom_call.1} parent=27 // pred_fallthru
          _
        %s211 = sand.u32 %s48, 1
        %s212 = scalar_lea.sflag [#allocation3], %s211
        %s213 = sand.u32 %s48, 1
        %s214 = smul.addr %s213, 16
        %s215 = scalar_lea.vmem [#allocation2], %s214
        %p216 = pneg %p61
        %p217 = pneg %p58
        %s218 = sand.u32 %s80, 1
        %s219 = scalar_lea.sflag [#allocation6], %s218
        %s220 = sand.u32 %s80, 1
        %s221 = smul.addr %s220, 16
        %s222 = scalar_lea.vmem [#allocation5], %s221
        %p223 = pneg %p93
        %p224 = pneg %p90
        %p225 = pneg %p119
        %p226 = pneg %p116
        %s227 = sand.u32 %s106, 1
        %s228 = scalar_lea.sflag [#allocation4], %s227
        %s229 = sand.u32 %s106, 1
        %s230 = smul.addr %s229, 8
        %s231 = scalar_lea.vmem [#allocation7], %s230
        %s232 = sadd.s32 %s26, %s27
        %p233 = scmp.lt.s32.totalorder %s232, 0
        %s234 = scalar_select %p233, %s232, 0
        %s235 = smul.u32 2, %s234
        %s236 = sadd.s32 %s26, %s27
        %p237 = scmp.lt.s32.totalorder %s236, 0
        %s238 = scalar_select %p237, %s236, 0
        %s239 = smul.u32 2, %s238
        %p240 = scmp.eq.s32.totalorder %s27, 0
        // Predicated region
        $region37: #{tpu_custom_call.1} parent=27 // pred_check
          %p241 = pneg %p240
        $region38: #{tpu_custom_call.1} parent=27 // pred_check_branch
          %243 = sbr.rel (%p241) target = $region40
        $region39: #{tpu_custom_call.1} parent=27 // pred_region
          %244 = vst [vmem:[%s231] sm:$0xff] 0.0
        $region40: #{tpu_custom_call.1} parent=27 // pred_fallthru
          _
        %v245 = vld [vmem:[%s197] sm:$0xff]
        %v246 = vld [vmem:[%s197 + $0x8] sm:$0xff]
        %v247 = vld [vmem:[%s206] sm:$0xff]
        %v248 = vld [vmem:[%s206 + $0x8] sm:$0xff]
        %v249 = vand.u32 2147483647, %v245
        %v250 = vand.u32 2147483647, %v246
        %v251 = vsub.f32 0.0, %v249
        %v252 = vsub.f32 0.0, %v250
        %v253 = vmul.f32 %v251, 1.442695
        %v254 = vpow.pop %v253
        %v255 = vmul.f32 %v252, 1.442695
        %v256 = vpow.pop %v255
        %v257 = vmax.f32 %v245, 0.0
        %v258 = vmax.f32 %v246, 0.0
        %v259 = vmul.f32 %v245, %v247
        %v260 = vmul.f32 %v246, %v248
        %v261 = vsub.f32 %v257, %v259
        %v262 = vsub.f32 %v258, %v260
        %v263 = vadd.f32 %v254, 1.0
        %v264 = vlog2.pop %v263
        %v265 = vmul.f32 %v264, 0.6931472
        %v266 = vmul.f32 -0.5, %v254
        %v267 = vadd.f32 %v266, 1.0
        %v268 = vmul.f32 %v267, %v254
        %v269 = vand.u32 2147483647, %v254
        %vm270 = vcmp.lt.f32.partialorder %v269, 0.0004427343
        %v271 = vsel %vm270, %v268, %v265
        %v272 = vadd.f32 %v256, 1.0
        %v273 = vlog2.pop %v272
        %v274 = vmul.f32 %v273, 0.6931472
        %v275 = vmul.f32 -0.5, %v256
        %v276 = vadd.f32 %v275, 1.0
        %v277 = vmul.f32 %v276, %v256
        %v278 = vand.u32 2147483647, %v256
        %vm279 = vcmp.lt.f32.partialorder %v278, 0.0004427343
        %v280 = vsel %vm279, %v277, %v274
        %v281 = vadd.f32 %v261, %v271
        %v282 = vadd.f32 %v262, %v280
        %v283 = vadd.f32 %v254, 1.0
        %v284 = vadd.f32 %v256, 1.0
        %v285 = vrcp.pop %v283
        %v286 = vrcp.pop %v284
        %v287 = vmul.f32 %v283, %v285
        %v288 = vmul.f32 %v284, %v286
        %v289 = vsub.f32 2.0, %v287
        %v290 = vsub.f32 2.0, %v288
        %v291 = vmul.f32 %v285, %v289
        %v292 = vmul.f32 %v286, %v290
        %vm293 = vcmp.ge.f32.partialorder %v245, 0.0
        %vm294 = vcmp.ge.f32.partialorder %v246, 0.0
        %v295 = vmul.f32 %v254, %v291
        %v296 = vmul.f32 %v256, %v292
        %v297 = vsel %vm293, %v291, %v295
        %v298 = vsel %vm294, %v292, %v296
        %v299 = vsub.f32 %v297, %v247
        %v300 = vsub.f32 %v298, %v248
        %v301 = vsub.f32 %v299, 1.0
        %v302 = vsub.f32 %v300, 1.0
        %v303 = vmul.f32 %v301, 19.96008
        %v304 = vmul.f32 %v302, 19.96008
        %v305 = vmul.f32 %v303, 1.442695
        %v306 = vpow.pop %v305
        %v307 = vmul.f32 %v304, 1.442695
        %v308 = vpow.pop %v307
        %v309 = vsub.f32 1.0, %v306
        %v310 = vsub.f32 1.0, %v308
        %v311 = vmul.f32 %v281, %v309
        %v312 = vmul.f32 %v282, %v310
        %s313 = sadd.s32 %s26, %s27
        %s314 = smul.u32 %s313, 16
        %s315 = sadd.s32 %s314, 16
        %p316 = scmp.gt.s32.totalorder %s315, 16
        %p317 = scmp.le.s32.totalorder %s315, 16
        // Predicated region
        $region41: #{tpu_custom_call.1} parent=27 // pred_check
          %p318 = pneg %p317
        $region42: #{tpu_custom_call.1} parent=27 // pred_check_branch
          %320 = sbr.rel (%p318) target = $region44
        $region43: #{tpu_custom_call.1} parent=27 // pred_region
          %v321 = vld [vmem:[%s231] sm:$0xff]
          %v322 = vadd.f32 %v311, %v312
          %v323 = vadd.f32 %v321, %v322
          %324 = vst [vmem:[%s231] sm:$0xff] %v323
        $region44: #{tpu_custom_call.1} parent=27 // pred_fallthru
          _
        // Predicated region
        $region45: #{tpu_custom_call.1} parent=27 // pred_check
          %p325 = pneg %p316
        $region46: #{tpu_custom_call.1} parent=27 // pred_check_branch
          %327 = sbr.rel (%p325) target = $region48
        $region47: #{tpu_custom_call.1} parent=27 // pred_region
          %v328 = vlaneseq
          %v329 = vshrl.u32 %v328, 7
          %v330 = vadd.s32 %v329, 8
          %v331 = vstv %s314
          %v332 = vadd.s32 %v331, %v329
          %v333 = vadd.s32 %v331, %v330
          %vm334 = vcmp.lt.s32.totalorder %v332, 16
          %vm335 = vcmp.lt.s32.totalorder %v333, 16
          %v336 = vsel %vm334, %v311, 0.0
          %v337 = vsel %vm335, %v312, 0.0
          %v338 = vld [vmem:[%s231] sm:$0xff]
          %v339 = vadd.f32 %v336, %v337
          %v340 = vadd.f32 %v338, %v339
          %341 = vst [vmem:[%s231] sm:$0xff] %v340
        $region48: #{tpu_custom_call.1} parent=27 // pred_fallthru
          _
        %s342 = sand.u32 %s106, 1
        %s343 = scalar_lea.sflag [#allocation4], %s342
        %s344 = sand.u32 %s106, 1
        %s345 = smul.addr %s344, 8
        %s346 = scalar_lea.vmem [#allocation7], %s345
        // Predicated region
        $region49: #{tpu_custom_call.1} parent=27 // pred_check
          %p347 = pneg %p116
        $region50: #{tpu_custom_call.1} parent=27 // pred_check_branch
          %349 = sbr.rel (%p347) target = $region52
        $region51: #{tpu_custom_call.1} parent=27 // pred_region
          %s351 = ssub.s32 128, 128
          %352 = vsyncadd %s343, %s351
          %s353 = smul.addr %s26, 128
          %s354 = scalar_lea.hbm %s2, %s353
          %s356 = sshll.u32 %s346, 4
          %s357 = int_to_ptr.vmem [resolvable:$true] %s356
          %359 = dma.vmem_to_hbm [thread:$0]  %s357, 128, %s354, %s343
        $region52: #{tpu_custom_call.1} parent=27 // pred_fallthru
          _
      $region28: #{tpu_custom_call.1} parent=5 // pred_fallthru
        _
      %p360 = scmp.le.s32.totalorder 2, %s17
      // Predicated region
      $region53: #{tpu_custom_call.1} parent=5 // pred_check
        %p361 = pneg %p360
      $region54: #{tpu_custom_call.1} parent=5 // pred_check_branch
        %363 = sbr.rel (%p361) target = $region56
      $region55: #{tpu_custom_call.1} parent=5 // pred_region
        %s364 = ssub.s32 %s17, 2
        // Predicated region
        $region57: #{tpu_custom_call.1} parent=55 // pred_check
          %p365 = pneg %p122
        $region58: #{tpu_custom_call.1} parent=55 // pred_check_branch
          %367 = sbr.rel (%p365) target = $region60
        $region59: #{tpu_custom_call.1} parent=55 // pred_region
          %s368 = sand.u32 %s107, 1
          %s369 = scalar_lea.sflag [#allocation4], %s368
          %s370 = sand.u32 %s107, 1
          %s371 = smul.addr %s370, 8
          %s372 = scalar_lea.vmem [#allocation7], %s371
          %373 = dma.done %s369, 128
        $region60: #{tpu_custom_call.1} parent=55 // pred_fallthru
          _
      $region56: #{tpu_custom_call.1} parent=5 // pred_fallthru
        _
    $region6: #{tpu_custom_call.1} parent=1 // loop_footer
      %s21 = sadd.s32 1, %s17
    $region7: #{tpu_custom_call.1} parent=1 // loop_footer_branch
      %16 = sbr.rel target = $region3
    $region8: #{tpu_custom_call.1} parent=1 // loop_exit
      _
    %374 = vsyncpa [#allocation3], 1
    %s375 = scalar_lea.sflag [#allocation3], 1
    %376 = vsyncpa %s375, 1
    %377 = vsyncpa [#allocation6], 1
    %s378 = scalar_lea.sflag [#allocation6], 1
    %379 = vsyncpa %s378, 1
    %380 = vsyncpa [#allocation4], 1
    %s381 = scalar_lea.sflag [#allocation4], 1
    %382 = vsyncpa %s381, 1

</llo_original>
